<compile_context>
chip_gen: v7x
topology: tpu7x:2x2x1
jax: 0.10.0
libtpu: 0.0.40
codegen_flags: <defaults>
</compile_context>

<pallas_src>
import functools

import jax
import jax.numpy as jnp
from jax import lax
from jax.experimental import pallas as pl
from jax.experimental.pallas import tpu as pltpu

H1 = 128
H2 = 64
LOG2 = 0.6931471805599453


def _ssp(x_f32, act_dtype):
    """Shifted softplus.  Bias add is done in f32 by the caller; the
    transcendental runs in act_dtype (bf16 on v6e/v7x, f32 on v5e)."""
    y = jax.nn.softplus(x_f32.astype(act_dtype))
    return y - jnp.asarray(LOG2, dtype=act_dtype)


def _pair_property_kernel(x_ref, w1_ref, b1_ref, w2_ref, b2_ref,
                          w3t_ref, b3_ref, o_ref, *,
                          cm, ns, operand_dtype, act_dtype):
    # Hoist resident weights / biases out of the sub-chunk loop.
    w1 = w1_ref[...]                                  # (F, 128)  operand_dtype
    w2 = w2_ref[...]                                  # (128, 64) operand_dtype
    w3t = w3t_ref[...]                                # (1, 64)   operand_dtype
    b1 = b1_ref[...].astype(jnp.float32)              # (1, 128)
    b2 = b2_ref[...].astype(jnp.float32)              # (1, 64)
    b3 = b3_ref[0, 0]                                 # scalar, SMEM

    def chunk(c, carry):
        off = pl.multiple_of(c * cm, cm)
        # In-kernel operand cast: MXU sees single-pass bf16, HBM still reads
        # the caller's dtype exactly once.
        x = x_ref[pl.ds(off, cm), :].astype(operand_dtype)   # (cm, F)

        # layer 1: (cm, F) @ (F, 128), f32 accumulation, bias add in f32
        h1 = jnp.dot(x, w1, preferred_element_type=jnp.float32)
        h1 = _ssp(h1 + b1, act_dtype)                         # (cm, 128) act_dtype

        # layer 2: (cm, 128) @ (128, 64)
        h2 = jnp.dot(h1.astype(w2.dtype), w2,
                     preferred_element_type=jnp.float32)
        h2 = _ssp(h2 + b2, act_dtype)                         # (cm, 64) act_dtype

        # layer 3 + lane-dense epilogue: contract w3^T (1, 64) against h2's
        # hidden dim (trans-B, M=1, bf16 operands) so the MXU directly emits
        # the (1, cm) output row.
        out_t = lax.dot_general(
            w3t, h2.astype(w3t.dtype),
            (((1,), (1,)), ((), ())),
            preferred_element_type=jnp.float32)               # (1, cm)
        o_ref[:, pl.ds(off, cm)] = (out_t + b3).astype(o_ref.dtype)
        return carry

    # Unrolled sub-chunk loop: lets the LLO scheduler overlap chunk k+1's
    # matmuls with chunk k's softplus (single-slot EUP).
    lax.fori_loop(0, ns, chunk, 0, unroll=True)


def _round_up(n, m):
    return ((n + m - 1) // m) * m


def _cdiv(a, b):
    return (a + b - 1) // b


@functools.partial(
    jax.jit,
    static_argnames=("tm", "ns", "operand_dtype", "act_dtype", "vmem_limit"))
def _pair_property_call(x, w1, b1, w2, b2, w3t, b3s, *,
                        tm, ns, operand_dtype, act_dtype, vmem_limit):
    rows, F = x.shape
    grid_rows = _cdiv(rows, tm)

    kernel = functools.partial(
        _pair_property_kernel, cm=tm // ns, ns=ns,
        operand_dtype=operand_dtype, act_dtype=act_dtype)

    return pl.pallas_call(
        kernel,
        out_shape=jax.ShapeDtypeStruct((grid_rows, 1, tm), jnp.float32),
        grid_spec=pltpu.PrefetchScalarGridSpec(
            num_scalar_prefetch=0,
            grid=(grid_rows,),
            in_specs=[
                pl.BlockSpec((tm, F), lambda i: (i, 0)),             # x tile
                pl.BlockSpec((F, H1), lambda i: (0, 0)),             # W1 (resident)
                pl.BlockSpec((1, H1), lambda i: (0, 0)),             # b1
                pl.BlockSpec((H1, H2), lambda i: (0, 0)),            # W2
                pl.BlockSpec((1, H2), lambda i: (0, 0)),             # b2
                pl.BlockSpec((1, H2), lambda i: (0, 0)),             # W3^T
                pl.BlockSpec(memory_space=pltpu.MemorySpace.SMEM),   # b3 scalar
            ],
            out_specs=pl.BlockSpec((None, 1, tm), lambda i: (i, 0, 0)),
        ),
        compiler_params=pltpu.CompilerParams(
            dimension_semantics=("parallel",),
            vmem_limit_bytes=vmem_limit),
    )(x, w1, b1, w2, b2, w3t, b3s)


def pair_property(msij, params, *, tm=2048, operand_dtype=jnp.bfloat16,
                  act_dtype=None):
    """msij: (..., F) float array. Returns (..., 1) float32.

    operand_dtype=bf16 (default) halves MXU passes; activations stay exact-ish
    (f32 bias add, bf16/f32 transcendental).  Pass operand_dtype=jnp.float32
    for the exact module semantics.
    """
    w1, b1, w2, b2, w3, b3 = params
    F = msij.shape[-1]
    lead = msij.shape[:-1]
    x = msij.reshape(-1, F)
    rows = x.shape[0]

    if operand_dtype is None:
        operand_dtype = jnp.float32
    operand_dtype = jnp.dtype(operand_dtype)

    # Generation-aware choices (trace-time Python; no in-kernel branching).
    kind = jax.devices()[0].device_kind.lower()
    bf16_eup = ("v6" in kind) or ("v7" in kind)        # bf16 VPU/EUP generations
    f32_only_gen = not bf16_eup                        # v5e and earlier
    if act_dtype is None:
        if operand_dtype == jnp.dtype(jnp.float32) or f32_only_gen:
            act_dtype = jnp.float32
        else:
            act_dtype = jnp.bfloat16
    act_dtype = jnp.dtype(act_dtype)

    # ---- Tile selection with VMEM budgeting ---------------------------------
    op_bytes = operand_dtype.itemsize
    in_bytes = jnp.dtype(x.dtype).itemsize
    lane_f = max(_round_up(F, 128), 128)               # x lane-padded in VMEM

    def _need(t):
        # x double-buffer (input dtype) + out double-buffer + per-tile f32
        # intermediates (conservative: full tile, not per-chunk) + weights.
        return (2 * t * lane_f * in_bytes
                + 2 * t * 4
                + t * (H1 + H2) * 4
                + (lane_f * H1 + H1 * H2) * op_bytes
                + (2 << 20))                           # slack

    budget = (10 << 20) if f32_only_gen else (24 << 20)

    assert tm % 128 == 0, "tm must be a multiple of 128 (lane-dense output)"
    tm_eff = max(128, min(_round_up(tm, 128), _round_up(rows, 128)))
    while tm_eff > 128 and _need(tm_eff) > budget:
        tm_eff -= 128

    # Prefer an even number (>=2) of grid steps so both v7x TensorCores stay
    # busy on the "parallel" axis (no-op for tiny inputs).
    grid_rows = _cdiv(rows, tm_eff)
    if rows >= 256 and grid_rows % 2 == 1:
        tm_alt = _round_up(_cdiv(rows, grid_rows + 1), 128)
        if tm_alt >= 128 and _cdiv(rows, tm_alt) % 2 == 0:
            tm_eff = tm_alt

    # Sub-chunks for MXU/EUP overlap inside a tile (cm multiple of 128).
    if tm_eff >= 1024:
        ns = 4
    elif tm_eff >= 256:
        ns = 2
    else:
        ns = 1
    while ns > 1 and tm_eff % (ns * 128) != 0:
        ns //= 2

    vmem_limit = 32 << 20

    # ---- Parameter staging (tiny; cast in wrapper) ---------------------------
    w1c = jnp.asarray(w1).astype(operand_dtype)                    # (F, 128)
    w2c = jnp.asarray(w2).astype(operand_dtype)                    # (128, 64)
    w3t = jnp.asarray(w3).reshape(1, H2).astype(operand_dtype)     # (1, 64)
    b1c = jnp.asarray(b1).reshape(1, H1).astype(jnp.float32)
    b2c = jnp.asarray(b2).reshape(1, H2).astype(jnp.float32)
    b3s = jnp.asarray(b3).reshape(1, 1).astype(jnp.float32)        # SMEM scalar

    out = _pair_property_call(
        x, w1c, b1c, w2c, b2c, w3t, b3s,
        tm=tm_eff, ns=ns, operand_dtype=operand_dtype,
        act_dtype=act_dtype, vmem_limit=vmem_limit)

    # Drop any ragged-tail garbage lanes, restore (..., 1).
    return out.reshape(-1)[:rows].reshape(*lead, 1)


def init_params(key, n_features):
    """Deterministic init matching the module's layer shapes."""
    ks = jax.random.split(key, 3)

    def glorot(k, fan_in, fan_out):
        lim = (6.0 / (fan_in + fan_out)) ** 0.5
        return jax.random.uniform(k, (fan_in, fan_out), jnp.float32, -lim, lim)

    w1 = glorot(ks[0], n_features, H1)
    b1 = jnp.zeros((1, H1), jnp.float32)
    w2 = glorot(ks[1], H1, H2)
    b2 = jnp.zeros((1, H2), jnp.float32)
    w3 = glorot(ks[2], H2, 1)
    b3 = jnp.zeros((1, 1), jnp.float32)
    return (w1, b1, w2, b2, w3, b3)


def _reference(msij, params):
    w1, b1, w2, b2, w3, b3 = params
    ssp = lambda v: jax.nn.softplus(v) - LOG2
    h = ssp(msij @ w1 + b1)
    h = ssp(h @ w2 + b2)
    return h @ w3 + b3


if __name__ == "__main__":
    key = jax.random.PRNGKey(0)
    k_x, k_p = jax.random.split(key)

    n_features = 32
    B, A = 2, 8                      # (B, A, A, F) pair features
    msij = jax.random.normal(k_x, (B, A, A, n_features), jnp.float32)
    params = init_params(k_p, n_features)

    ref = _reference(msij, params)

    # Exact f32 path: matches module semantics tightly.
    out_f32 = jax.block_until_ready(
        pair_property(msij, params, operand_dtype=jnp.float32))
    assert out_f32.shape == (B, A, A, 1), out_f32.shape
    if not jnp.allclose(out_f32, ref, atol=1e-4, rtol=1e-4):
        raise AssertionError("Pallas kernel (f32) mismatch vs reference")

    # Default fast path: bf16 MXU operands (+ bf16 softplus on v6e/v7x).
    # Precision intentionally relaxed; loose tolerance.
    out_fast = jax.block_until_ready(pair_property(msij, params))
    assert out_fast.shape == (B, A, A, 1), out_fast.shape
    if not jnp.allclose(out_fast, ref, atol=5e-2, rtol=5e-2):
        raise AssertionError("Pallas kernel (bf16) mismatch vs reference")

    print("KERNEL_OK")
</pallas_src>

<mosaic_0001>
module attributes {stable_mosaic.version = 11 : i64} {
  func.func @_pair_property_kernel(%arg0: i32, %arg1: memref<128x32xf32, #tpu.memory_space<vmem>>, %arg2: memref<32x128xf32, #tpu.memory_space<vmem>>, %arg3: memref<1x128xf32, #tpu.memory_space<vmem>>, %arg4: memref<128x64xf32, #tpu.memory_space<vmem>>, %arg5: memref<1x64xf32, #tpu.memory_space<vmem>>, %arg6: memref<1x64xf32, #tpu.memory_space<vmem>>, %arg7: memref<1x1xf32, #tpu.memory_space<smem>>, %arg8: memref<1x1x128xf32, #tpu.memory_space<vmem>>) attributes {dimension_semantics = [#tpu.dimension_semantics<parallel>], iteration_bounds = array<i64: 1>, scalar_prefetch = 0 : i64, scratch_operands = 0 : i64, tpu.core_type = #tpu.core_type<tc>, window_params = [{transform_indices = @transform_0, window_bounds = array<i64: 128, 32>}, {pipeline_mode = #tpu.pipeline_mode<synchronous>, transform_indices = @transform_1, window_bounds = array<i64: 32, 128>}, {pipeline_mode = #tpu.pipeline_mode<synchronous>, transform_indices = @transform_2, window_bounds = array<i64: 1, 128>}, {pipeline_mode = #tpu.pipeline_mode<synchronous>, transform_indices = @transform_3, window_bounds = array<i64: 128, 64>}, {pipeline_mode = #tpu.pipeline_mode<synchronous>, transform_indices = @transform_4, window_bounds = array<i64: 1, 64>}, {pipeline_mode = #tpu.pipeline_mode<synchronous>, transform_indices = @transform_5, window_bounds = array<i64: 1, 64>}, {transform_indices = @transform_6, window_bounds = array<i64: 1, 1>}, {transform_indices = @transform_7, window_bounds = array<i64: 1, 1, 128>}]} {
    %c0 = arith.constant 0 : index
    %c0_0 = arith.constant 0 : index
    %0 = vector.load %arg2[%c0, %c0_0] : memref<32x128xf32, #tpu.memory_space<vmem>>, vector<32x128xf32>
    %c0_1 = arith.constant 0 : index
    %c0_2 = arith.constant 0 : index
    %1 = vector.load %arg4[%c0_1, %c0_2] : memref<128x64xf32, #tpu.memory_space<vmem>>, vector<128x64xf32>
    %c0_3 = arith.constant 0 : index
    %c0_4 = arith.constant 0 : index
    %2 = vector.load %arg6[%c0_3, %c0_4] : memref<1x64xf32, #tpu.memory_space<vmem>>, vector<1x64xf32>
    %c0_5 = arith.constant 0 : index
    %c0_6 = arith.constant 0 : index
    %3 = vector.load %arg3[%c0_5, %c0_6] : memref<1x128xf32, #tpu.memory_space<vmem>>, vector<1x128xf32>
    %c0_7 = arith.constant 0 : index
    %c0_8 = arith.constant 0 : index
    %4 = vector.load %arg5[%c0_7, %c0_8] : memref<1x64xf32, #tpu.memory_space<vmem>>, vector<1x64xf32>
    %c0_9 = arith.constant 0 : index
    %c0_10 = arith.constant 0 : index
    %5 = memref.load %arg7[%c0_9, %c0_10] : memref<1x1xf32, #tpu.memory_space<smem>>
    %c0_i32 = arith.constant 0 : i32
    %c128_i32 = arith.constant 128 : i32
    %6 = arith.muli %c0_i32, %c128_i32 : i32
    %7 = tpu.assume_multiple %6, 128 : i32
    %8 = arith.index_cast %7 : i32 to index
    %c0_11 = arith.constant 0 : index
    %9 = vector.load %arg1[%8, %c0_11] : memref<128x32xf32, #tpu.memory_space<vmem>>, vector<128x32xf32>
    %cst = arith.constant dense<0.000000e+00> : vector<128x128xf32>
    %10 = tpu.matmul %9, %0, %cst {dimension_numbers = #tpu.dot_dimension_numbers<[1], [0], [0], [1], [0, 0, 1, 1], [], []>} : vector<128x32xf32>, vector<32x128xf32>, vector<128x128xf32> -> vector<128x128xf32>
    %11 = vector.broadcast %3 : vector<1x128xf32> to vector<128x128xf32>
    %12 = arith.addf %10, %11 : vector<128x128xf32>
    %cst_12 = arith.constant 0.000000e+00 : f32
    %13 = vector.broadcast %cst_12 : f32 to vector<128x128xf32>
    %14 = arith.maximumf %12, %13 : vector<128x128xf32>
    %15 = vector.broadcast %cst_12 : f32 to vector<128x128xf32>
    %16 = arith.subf %12, %15 : vector<128x128xf32>
    %17 = arith.cmpf one, %16, %16 : vector<128x128xf32>
    %18 = vector.broadcast %cst_12 : f32 to vector<128x128xf32>
    %19 = arith.addf %12, %18 : vector<128x128xf32>
    %20 = math.absf %16 : vector<128x128xf32>
    %cst_13 = arith.constant 0.000000e+00 : f32
    %21 = vector.broadcast %cst_13 : f32 to vector<128x128xf32>
    %22 = arith.subf %21, %20 : vector<128x128xf32>
    %23 = math.exp %22 : vector<128x128xf32>
    %24 = math.log1p %23 : vector<128x128xf32>
    %25 = arith.addf %14, %24 : vector<128x128xf32>
    %26 = arith.select %17, %19, %25 : vector<128x128xi1>, vector<128x128xf32>
    %cst_14 = arith.constant 0.693147182 : f32
    %27 = vector.broadcast %cst_14 : f32 to vector<128x128xf32>
    %28 = arith.subf %26, %27 : vector<128x128xf32>
    %cst_15 = arith.constant dense<0.000000e+00> : vector<128x64xf32>
    %29 = tpu.matmul %28, %1, %cst_15 {dimension_numbers = #tpu.dot_dimension_numbers<[1], [0], [0], [1], [0, 0, 1, 1], [], []>} : vector<128x128xf32>, vector<128x64xf32>, vector<128x64xf32> -> vector<128x64xf32>
    %30 = vector.broadcast %4 : vector<1x64xf32> to vector<128x64xf32>
    %31 = arith.addf %29, %30 : vector<128x64xf32>
    %cst_16 = arith.constant 0.000000e+00 : f32
    %32 = vector.broadcast %cst_16 : f32 to vector<128x64xf32>
    %33 = arith.maximumf %31, %32 : vector<128x64xf32>
    %34 = vector.broadcast %cst_16 : f32 to vector<128x64xf32>
    %35 = arith.subf %31, %34 : vector<128x64xf32>
    %36 = arith.cmpf one, %35, %35 : vector<128x64xf32>
    %37 = vector.broadcast %cst_16 : f32 to vector<128x64xf32>
    %38 = arith.addf %31, %37 : vector<128x64xf32>
    %39 = math.absf %35 : vector<128x64xf32>
    %cst_17 = arith.constant 0.000000e+00 : f32
    %40 = vector.broadcast %cst_17 : f32 to vector<128x64xf32>
    %41 = arith.subf %40, %39 : vector<128x64xf32>
    %42 = math.exp %41 : vector<128x64xf32>
    %43 = math.log1p %42 : vector<128x64xf32>
    %44 = arith.addf %33, %43 : vector<128x64xf32>
    %45 = arith.select %36, %38, %44 : vector<128x64xi1>, vector<128x64xf32>
    %cst_18 = arith.constant 0.693147182 : f32
    %46 = vector.broadcast %cst_18 : f32 to vector<128x64xf32>
    %47 = arith.subf %45, %46 : vector<128x64xf32>
    %cst_19 = arith.constant dense<0.000000e+00> : vector<1x128xf32>
    %48 = tpu.matmul %2, %47, %cst_19 {dimension_numbers = #tpu.dot_dimension_numbers<[1], [1], [0], [0], [0, 0, 1, 0], [], []>} : vector<1x64xf32>, vector<128x64xf32>, vector<1x128xf32> -> vector<1x128xf32>
    %49 = vector.broadcast %5 : f32 to vector<1x128xf32>
    %50 = arith.addf %48, %49 : vector<1x128xf32>
    %c0_20 = arith.constant 0 : index
    %c0_21 = arith.constant 0 : index
    %51 = arith.index_cast %7 : i32 to index
    %52 = vector.load %arg8[%c0_20, %c0_21, %51] : memref<1x1x128xf32, #tpu.memory_space<vmem>>, vector<1x1x128xf32>
    %53 = vector.shape_cast %52 : vector<1x1x128xf32> to vector<1x128xf32>
    %54 = vector.shape_cast %50 : vector<1x128xf32> to vector<1x1x128xf32>
    tpu.vector_store %arg8[%c0_20, %c0_21, %51], %54 {strides = array<i32>} : memref<1x1x128xf32, #tpu.memory_space<vmem>>, vector<1x1x128xf32>,
    %c1_i32 = arith.constant 1 : i32
    return
  }
  func.func @transform_0(%arg0: i32) -> (i32, i32) {
    %c0_i32 = arith.constant 0 : i32
    %c0_i32_0 = arith.constant 0 : i32
    return %arg0, %c0_i32 : i32, i32
  }
  func.func @transform_1(%arg0: i32) -> (i32, i32) {
    %c0_i32 = arith.constant 0 : i32
    %c0_i32_0 = arith.constant 0 : i32
    %c0_i32_1 = arith.constant 0 : i32
    return %c0_i32, %c0_i32_0 : i32, i32
  }
  func.func @transform_2(%arg0: i32) -> (i32, i32) {
    %c0_i32 = arith.constant 0 : i32
    %c0_i32_0 = arith.constant 0 : i32
    %c0_i32_1 = arith.constant 0 : i32
    return %c0_i32, %c0_i32_0 : i32, i32
  }
  func.func @transform_3(%arg0: i32) -> (i32, i32) {
    %c0_i32 = arith.constant 0 : i32
    %c0_i32_0 = arith.constant 0 : i32
    %c0_i32_1 = arith.constant 0 : i32
    return %c0_i32, %c0_i32_0 : i32, i32
  }
  func.func @transform_4(%arg0: i32) -> (i32, i32) {
    %c0_i32 = arith.constant 0 : i32
    %c0_i32_0 = arith.constant 0 : i32
    %c0_i32_1 = arith.constant 0 : i32
    return %c0_i32, %c0_i32_0 : i32, i32
  }
  func.func @transform_5(%arg0: i32) -> (i32, i32) {
    %c0_i32 = arith.constant 0 : i32
    %c0_i32_0 = arith.constant 0 : i32
    %c0_i32_1 = arith.constant 0 : i32
    return %c0_i32, %c0_i32_0 : i32, i32
  }
  func.func @transform_6(%arg0: i32) -> (i32, i32) {
    %c0_i32 = arith.constant 0 : i32
    %c0_i32_0 = arith.constant 0 : i32
    %c0_i32_1 = arith.constant 0 : i32
    return %c0_i32, %c0_i32_0 : i32, i32
  }
  func.func @transform_7(%arg0: i32) -> (i32, i32, i32) {
    %c0_i32 = arith.constant 0 : i32
    %c0_i32_0 = arith.constant 0 : i32
    %c0_i32_1 = arith.constant 0 : i32
    return %arg0, %c0_i32, %c0_i32_0 : i32, i32, i32
  }
}

</mosaic_0001>

<llo_original>
// kernel: _pair_property_call.1
$region0: #{_pair_property_call.1}
  #allocation0 [shape = 'u32[]', space=smem, size = 0x4, offset = 0x4, fixed_abs, tag = 'smem constant byte address 0x4 - core index']
  #allocation1 [shape = 'u32[144,128]{1,0:T(1,128)}', space=vmem, size = 0x12000, scoped, tag = 'internal scratch']
  #allocation2 [shape = 'f32[1,1]{1,0:T(1,128)S(6)}', space=smem, size = 0x200, scoped, tag = 'scoped memory for _pair_property_call.1']
  %s0 = inlined_call_operand.vmem [shape: f32[128,32], index: 0, kind: input, shape index: {}]
  %s1 = inlined_call_operand.vmem [shape: f32[32,128], index: 1, kind: input, shape index: {}]
  %s2 = inlined_call_operand.vmem [shape: f32[1,128], index: 2, kind: input, shape index: {}]
  %s3 = inlined_call_operand.vmem [shape: f32[128,64], index: 3, kind: input, shape index: {}]
  %s4 = inlined_call_operand.vmem [shape: f32[1,64], index: 4, kind: input, shape index: {}]
  %s5 = inlined_call_operand.vmem [shape: f32[1,64], index: 5, kind: input, shape index: {}]
  %s6 = inlined_call_operand.<no memory space> [shape: f32[1,1], index: 6, kind: input, shape index: {}]
  %s7 = inlined_call_operand.hbm [shape: f32[1,1,128], index: 7, kind: output, shape index: {}]
  %s8 = sld [smem:[#allocation0]]
  $region38: #{_pair_property_call.1} parent=0
    _
  %s10 = ssub.s32 1, %s8
  %s11 = scalar_select 0, %s10, %s8
  %12 = sst [smem:[#allocation2]] %s6
  $region1: #{_pair_property_call.1} parent=0
    #allocation3 [shape = 'u8[512]{0}', space=vmem, size = 0x400, scoped, tag = 'output window, operand 0, single buffered']
    #allocation4 [shape = 's32[1]{0}', space=sflag, size = 0x4, scoped, tag = 'scoped memory for _pair_property_call.1']
    %13 = vsyncpa [#allocation4], 0
    // Predicated region
    $region2: #{_pair_property_call.1} parent=1 // pred_check
      _
    $region3: #{_pair_property_call.1} parent=1 // pred_check_branch
      %15 = sbr.rel (0) target = $region5
    $region4: #{_pair_property_call.1} parent=1 // pred_region
      _
    $region5: #{_pair_property_call.1} parent=1 // pred_fallthru
      _
    // Predicated region
    $region6: #{_pair_property_call.1} parent=1 // pred_check
      _
    $region7: #{_pair_property_call.1} parent=1 // pred_check_branch
      %17 = sbr.rel (0) target = $region9
    $region8: #{_pair_property_call.1} parent=1 // pred_region
      _
    $region9: #{_pair_property_call.1} parent=1 // pred_fallthru
      _
    // Predicated region
    $region10: #{_pair_property_call.1} parent=1 // pred_check
      _
    $region11: #{_pair_property_call.1} parent=1 // pred_check_branch
      %19 = sbr.rel (0) target = $region13
    $region12: #{_pair_property_call.1} parent=1 // pred_region
      _
    $region13: #{_pair_property_call.1} parent=1 // pred_fallthru
      _
    // Predicated region
    $region14: #{_pair_property_call.1} parent=1 // pred_check
      _
    $region15: #{_pair_property_call.1} parent=1 // pred_check_branch
      %21 = sbr.rel (0) target = $region17
    $region16: #{_pair_property_call.1} parent=1 // pred_region
      _
    $region17: #{_pair_property_call.1} parent=1 // pred_fallthru
      _
    // Predicated region
    $region18: #{_pair_property_call.1} parent=1 // pred_check
      _
    $region19: #{_pair_property_call.1} parent=1 // pred_check_branch
      %23 = sbr.rel (0) target = $region21
    $region20: #{_pair_property_call.1} parent=1 // pred_region
      _
    $region21: #{_pair_property_call.1} parent=1 // pred_fallthru
      _
    // Predicated region
    $region22: #{_pair_property_call.1} parent=1 // pred_check
      _
    $region23: #{_pair_property_call.1} parent=1 // pred_check_branch
      %25 = sbr.rel (0) target = $region25
    $region24: #{_pair_property_call.1} parent=1 // pred_region
      _
    $region25: #{_pair_property_call.1} parent=1 // pred_fallthru
      _
    // Predicated region
    $region26: #{_pair_property_call.1} parent=1 // pred_check
      _
    $region27: #{_pair_property_call.1} parent=1 // pred_check_branch
      %27 = sbr.rel (0) target = $region29
    $region28: #{_pair_property_call.1} parent=1 // pred_region
      _
    $region29: #{_pair_property_call.1} parent=1 // pred_fallthru
      _
    %v28 = vld [vmem:[%s1] sm:$0xff]
    %v29 = vld [vmem:[%s1 + $0x8] sm:$0xff]
    %v30 = vld [vmem:[%s1 + $0x10] sm:$0xff]
    %v31 = vld [vmem:[%s1 + $0x18] sm:$0xff]
    %v32 = vld [vmem:[%s3] sm:$0xff]
    %v33 = vld [vmem:[%s3 + $0x8] sm:$0xff]
    %v34 = vld [vmem:[%s3 + $0x10] sm:$0xff]
    %v35 = vld [vmem:[%s3 + $0x18] sm:$0xff]
    %v36 = vld [vmem:[%s3 + $0x20] sm:$0xff]
    %v37 = vld [vmem:[%s3 + $0x28] sm:$0xff]
    %v38 = vld [vmem:[%s3 + $0x30] sm:$0xff]
    %v39 = vld [vmem:[%s3 + $0x38] sm:$0xff]
    %v40 = vld [vmem:[%s3 + $0x40] sm:$0xff]
    %v41 = vld [vmem:[%s3 + $0x48] sm:$0xff]
    %v42 = vld [vmem:[%s3 + $0x50] sm:$0xff]
    %v43 = vld [vmem:[%s3 + $0x58] sm:$0xff]
    %v44 = vld [vmem:[%s3 + $0x60] sm:$0xff]
    %v45 = vld [vmem:[%s3 + $0x68] sm:$0xff]
    %v46 = vld [vmem:[%s3 + $0x70] sm:$0xff]
    %v47 = vld [vmem:[%s3 + $0x78] sm:$0xff]
    %v48 = vld [vmem:[%s5] sm:$0x1]
    %v49 = vld [vmem:[%s2] sm:$0x1]
    %v50 = vld [vmem:[%s4] sm:$0x1]
    %s51 = sld [smem:[#allocation2]]
    %v52 = vld [vmem:[%s0] sm:$0xff]
    %v53 = vld [vmem:[%s0 + $0x8] sm:$0xff]
    %v54 = vld [vmem:[%s0 + $0x10] sm:$0xff]
    %v55 = vld [vmem:[%s0 + $0x18] sm:$0xff]
    %v56 = vld [vmem:[%s0 + $0x20] sm:$0xff]
    %v57 = vld [vmem:[%s0 + $0x28] sm:$0xff]
    %v58 = vld [vmem:[%s0 + $0x30] sm:$0xff]
    %v59 = vld [vmem:[%s0 + $0x38] sm:$0xff]
    %v60 = vld [vmem:[%s0 + $0x40] sm:$0xff]
    %v61 = vld [vmem:[%s0 + $0x48] sm:$0xff]
    %v62 = vld [vmem:[%s0 + $0x50] sm:$0xff]
    %v63 = vld [vmem:[%s0 + $0x58] sm:$0xff]
    %v64 = vld [vmem:[%s0 + $0x60] sm:$0xff]
    %v65 = vld [vmem:[%s0 + $0x68] sm:$0xff]
    %v66 = vld [vmem:[%s0 + $0x70] sm:$0xff]
    %v67 = vld [vmem:[%s0 + $0x78] sm:$0xff]
    %v69 = vlaneseq
    %v70 = vshrl.u32 %v69, 7
    %v71 = vsub.s32 0, %v70
    %v72 = vrot.slane %v49, %v71
    %vm74 = vcmask 261120
    %v76 = vsel %vm74, %v52, 0
    %v79 = vsel %vm74, %v53, 0
    %v82 = vsel %vm74, %v54, 0
    %v85 = vsel %vm74, %v55, 0
    %v88 = vsel %vm74, %v56, 0
    %v91 = vsel %vm74, %v57, 0
    %v94 = vsel %vm74, %v58, 0
    %v97 = vsel %vm74, %v59, 0
    %v100 = vsel %vm74, %v60, 0
    %v103 = vsel %vm74, %v61, 0
    %v106 = vsel %vm74, %v62, 0
    %v109 = vsel %vm74, %v63, 0
    %v112 = vsel %vm74, %v64, 0
    %v115 = vsel %vm74, %v65, 0
    %v118 = vsel %vm74, %v66, 0
    %v121 = vsel %vm74, %v67, 0
    %123 = vmatprep.subr.mxu0 0.0
    %124 = vmatpush1.msra.mxu0 %v28
    %125 = vmatprep.subr.mxu0 0.0
    %126 = vmatpush1.msra.mxu0 %v29
    %127 = vmatprep.subr.mxu0 0.0
    %128 = vmatpush1.msra.mxu0 %v30
    %129 = vmatprep.subr.mxu0 0.0
    %130 = vmatpush1.msra.mxu0 %v31
    %131 = vmatprep.subr.mxu0 0.0
    %132 = vmatpush1.msra.mxu0 0.0
    %133 = vmatprep.subr.mxu0 0.0
    %134 = vmatpush1.msra.mxu0 0.0
    %135 = vmatprep.subr.mxu0 0.0
    %136 = vmatpush1.msra.mxu0 0.0
    %137 = vmatprep.subr.mxu0 0.0
    %138 = vmatpush1.msra.mxu0 0.0
    %139 = vmatprep.subr.mxu0 0.0
    %140 = vmatpush1.msra.mxu0 0.0
    %141 = vmatprep.subr.mxu0 0.0
    %142 = vmatpush1.msra.mxu0 0.0
    %143 = vmatprep.subr.mxu0 0.0
    %144 = vmatpush1.msra.mxu0 0.0
    %145 = vmatprep.subr.mxu0 0.0
    %146 = vmatpush1.msra.mxu0 0.0
    %147 = vmatprep.subr.mxu0 0.0
    %148 = vmatpush1.msra.mxu0 0.0
    %149 = vmatprep.subr.mxu0 0.0
    %150 = vmatpush1.msra.mxu0 0.0
    %151 = vmatprep.subr.mxu0 0.0
    %152 = vmatpush1.msra.mxu0 0.0
    %153 = vmatprep.subr.mxu0 0.0
    %154 = vmatpush1.msra.mxu0 0.0
    %155 = vmatprep.subr.mxu0 0.0
    %156 = vmatpush1.msra.mxu0 0.0
    %157 = vmatprep.subr.mxu0 0.0
    %158 = vmatpush1.msra.mxu0 0.0
    %159 = vmatprep.subr.mxu0 0.0
    %160 = vmatpush1.msra.mxu0 0.0
    %161 = vmatprep.subr.mxu0 0.0
    %162 = vmatpush1.msra.mxu0 0.0
    %163 = vmatprep.subr.mxu0 0.0
    %164 = vmatpush1.msra.mxu0 0.0
    %165 = vmatprep.subr.mxu0 0.0
    %166 = vmatpush1.msra.mxu0 0.0
    %167 = vmatprep.subr.mxu0 0.0
    %168 = vmatpush1.msra.mxu0 0.0
    %169 = vmatprep.subr.mxu0 0.0
    %170 = vmatpush1.msra.mxu0 0.0
    %171 = vmatprep.subr.mxu0 0.0
    %172 = vmatpush1.msra.mxu0 0.0
    %173 = vmatprep.subr.mxu0 0.0
    %174 = vmatpush1.msra.mxu0 0.0
    %175 = vmatprep.subr.mxu0 0.0
    %176 = vmatpush1.msra.mxu0 0.0
    %177 = vmatprep.subr.mxu0 0.0
    %178 = vmatpush1.msra.mxu0 0.0
    %179 = vmatprep.subr.mxu0 0.0
    %180 = vmatpush1.msra.mxu0 0.0
    %181 = vmatprep.subr.mxu0 0.0
    %182 = vmatpush1.msra.mxu0 0.0
    %183 = vmatprep.subr.mxu0 0.0
    %184 = vmatpush1.msra.mxu0 0.0
    %185 = vmatprep.subr.mxu0 0.0
    %186 = vmatpush1.msra.mxu0 0.0
    %187 = vmatprep.mubr.f32.mxu0 0.0
    %188 = vmatmul.mubr.f32.gmra.mrb[0].mxu0 %v76
    %v189 = vpop.f32.mrb[0].mxu0
    %v190 = vadd.f32 %v72, %v189
    %v191 = vpop.f32.mrb[0].mxu0
    %192 = vmatprep.mubr.f32.mxu0 0.0
    %193 = vmatmul.mubr.f32.gmra.mrb[0].mxu0 %v79
    %v194 = vpop.f32.mrb[0].mxu0
    %v195 = vadd.f32 %v72, %v194
    %v196 = vpop.f32.mrb[0].mxu0
    %197 = vmatprep.mubr.f32.mxu0 0.0
    %198 = vmatmul.mubr.f32.gmra.mrb[0].mxu0 %v82
    %v199 = vpop.f32.mrb[0].mxu0
    %v200 = vadd.f32 %v72, %v199
    %v201 = vpop.f32.mrb[0].mxu0
    %202 = vmatprep.mubr.f32.mxu0 0.0
    %203 = vmatmul.mubr.f32.gmra.mrb[0].mxu0 %v85
    %v204 = vpop.f32.mrb[0].mxu0
    %v205 = vadd.f32 %v72, %v204
    %v206 = vpop.f32.mrb[0].mxu0
    %207 = vmatprep.mubr.f32.mxu0 0.0
    %208 = vmatmul.mubr.f32.gmra.mrb[0].mxu0 %v88
    %v209 = vpop.f32.mrb[0].mxu0
    %v210 = vadd.f32 %v72, %v209
    %v211 = vpop.f32.mrb[0].mxu0
    %212 = vmatprep.mubr.f32.mxu0 0.0
    %213 = vmatmul.mubr.f32.gmra.mrb[0].mxu0 %v91
    %v214 = vpop.f32.mrb[0].mxu0
    %v215 = vadd.f32 %v72, %v214
    %v216 = vpop.f32.mrb[0].mxu0
    %217 = vmatprep.mubr.f32.mxu0 0.0
    %218 = vmatmul.mubr.f32.gmra.mrb[0].mxu0 %v94
    %v219 = vpop.f32.mrb[0].mxu0
    %v220 = vadd.f32 %v72, %v219
    %v221 = vpop.f32.mrb[0].mxu0
    %222 = vmatprep.mubr.f32.mxu0 0.0
    %223 = vmatmul.mubr.f32.gmra.mrb[0].mxu0 %v97
    %v224 = vpop.f32.mrb[0].mxu0
    %v225 = vadd.f32 %v72, %v224
    %v226 = vpop.f32.mrb[0].mxu0
    %227 = vmatprep.mubr.f32.mxu0 0.0
    %228 = vmatmul.mubr.f32.gmra.mrb[0].mxu0 %v100
    %v229 = vpop.f32.mrb[0].mxu0
    %v230 = vadd.f32 %v72, %v229
    %v231 = vpop.f32.mrb[0].mxu0
    %232 = vmatprep.mubr.f32.mxu0 0.0
    %233 = vmatmul.mubr.f32.gmra.mrb[0].mxu0 %v103
    %v234 = vpop.f32.mrb[0].mxu0
    %v235 = vadd.f32 %v72, %v234
    %v236 = vpop.f32.mrb[0].mxu0
    %237 = vmatprep.mubr.f32.mxu0 0.0
    %238 = vmatmul.mubr.f32.gmra.mrb[0].mxu0 %v106
    %v239 = vpop.f32.mrb[0].mxu0
    %v240 = vadd.f32 %v72, %v239
    %v241 = vpop.f32.mrb[0].mxu0
    %242 = vmatprep.mubr.f32.mxu0 0.0
    %243 = vmatmul.mubr.f32.gmra.mrb[0].mxu0 %v109
    %v244 = vpop.f32.mrb[0].mxu0
    %v245 = vadd.f32 %v72, %v244
    %v246 = vpop.f32.mrb[0].mxu0
    %247 = vmatprep.mubr.f32.mxu0 0.0
    %248 = vmatmul.mubr.f32.gmra.mrb[0].mxu0 %v112
    %v249 = vpop.f32.mrb[0].mxu0
    %v250 = vadd.f32 %v72, %v249
    %v251 = vpop.f32.mrb[0].mxu0
    %252 = vmatprep.mubr.f32.mxu0 0.0
    %253 = vmatmul.mubr.f32.gmra.mrb[0].mxu0 %v115
    %v254 = vpop.f32.mrb[0].mxu0
    %v255 = vadd.f32 %v72, %v254
    %v256 = vpop.f32.mrb[0].mxu0
    %257 = vmatprep.mubr.f32.mxu0 0.0
    %258 = vmatmul.mubr.f32.gmra.mrb[0].mxu0 %v118
    %v259 = vpop.f32.mrb[0].mxu0
    %v260 = vadd.f32 %v72, %v259
    %v261 = vpop.f32.mrb[0].mxu0
    %262 = vmatprep.mubr.f32.mxu0 0.0
    %263 = vmatmul.mubr.f32.gmra.mrb[0].mxu0 %v121
    %v264 = vpop.f32.mrb[0].mxu0
    %v265 = vadd.f32 %v72, %v264
    %v266 = vpop.f32.mrb[0].mxu0
    %267 = vdwg.mxu0
    %v268 = vmax.f32 %v190, 0.0
    %v269 = vmax.f32 %v195, 0.0
    %v270 = vmax.f32 %v200, 0.0
    %v271 = vmax.f32 %v205, 0.0
    %v272 = vmax.f32 %v210, 0.0
    %v273 = vmax.f32 %v215, 0.0
    %v274 = vmax.f32 %v220, 0.0
    %v275 = vmax.f32 %v225, 0.0
    %v276 = vmax.f32 %v230, 0.0
    %v277 = vmax.f32 %v235, 0.0
    %v278 = vmax.f32 %v240, 0.0
    %v279 = vmax.f32 %v245, 0.0
    %v280 = vmax.f32 %v250, 0.0
    %v281 = vmax.f32 %v255, 0.0
    %v282 = vmax.f32 %v260, 0.0
    %v283 = vmax.f32 %v265, 0.0
    %vm284 = vcmp.ne.f32.partialorder %v190, %v190
    %vm285 = vcmp.ne.f32.partialorder %v195, %v195
    %vm286 = vcmp.ne.f32.partialorder %v200, %v200
    %vm287 = vcmp.ne.f32.partialorder %v205, %v205
    %vm288 = vcmp.ne.f32.partialorder %v210, %v210
    %vm289 = vcmp.ne.f32.partialorder %v215, %v215
    %vm290 = vcmp.ne.f32.partialorder %v220, %v220
    %vm291 = vcmp.ne.f32.partialorder %v225, %v225
    %vm292 = vcmp.ne.f32.partialorder %v230, %v230
    %vm293 = vcmp.ne.f32.partialorder %v235, %v235
    %vm294 = vcmp.ne.f32.partialorder %v240, %v240
    %vm295 = vcmp.ne.f32.partialorder %v245, %v245
    %vm296 = vcmp.ne.f32.partialorder %v250, %v250
    %vm297 = vcmp.ne.f32.partialorder %v255, %v255
    %vm298 = vcmp.ne.f32.partialorder %v260, %v260
    %vm299 = vcmp.ne.f32.partialorder %v265, %v265
    %v300 = vadd.f32 %v190, 0.0
    %v301 = vadd.f32 %v195, 0.0
    %v302 = vadd.f32 %v200, 0.0
    %v303 = vadd.f32 %v205, 0.0
    %v304 = vadd.f32 %v210, 0.0
    %v305 = vadd.f32 %v215, 0.0
    %v306 = vadd.f32 %v220, 0.0
    %v307 = vadd.f32 %v225, 0.0
    %v308 = vadd.f32 %v230, 0.0
    %v309 = vadd.f32 %v235, 0.0
    %v310 = vadd.f32 %v240, 0.0
    %v311 = vadd.f32 %v245, 0.0
    %v312 = vadd.f32 %v250, 0.0
    %v313 = vadd.f32 %v255, 0.0
    %v314 = vadd.f32 %v260, 0.0
    %v315 = vadd.f32 %v265, 0.0
    %v316 = vand.u32 2147483647, %v190
    %v317 = vand.u32 2147483647, %v195
    %v318 = vand.u32 2147483647, %v200
    %v319 = vand.u32 2147483647, %v205
    %v320 = vand.u32 2147483647, %v210
    %v321 = vand.u32 2147483647, %v215
    %v322 = vand.u32 2147483647, %v220
    %v323 = vand.u32 2147483647, %v225
    %v324 = vand.u32 2147483647, %v230
    %v325 = vand.u32 2147483647, %v235
    %v326 = vand.u32 2147483647, %v240
    %v327 = vand.u32 2147483647, %v245
    %v328 = vand.u32 2147483647, %v250
    %v329 = vand.u32 2147483647, %v255
    %v330 = vand.u32 2147483647, %v260
    %v331 = vand.u32 2147483647, %v265
    %v332 = vsub.f32 0.0, %v316
    %v333 = vsub.f32 0.0, %v317
    %v334 = vsub.f32 0.0, %v318
    %v335 = vsub.f32 0.0, %v319
    %v336 = vsub.f32 0.0, %v320
    %v337 = vsub.f32 0.0, %v321
    %v338 = vsub.f32 0.0, %v322
    %v339 = vsub.f32 0.0, %v323
    %v340 = vsub.f32 0.0, %v324
    %v341 = vsub.f32 0.0, %v325
    %v342 = vsub.f32 0.0, %v326
    %v343 = vsub.f32 0.0, %v327
    %v344 = vsub.f32 0.0, %v328
    %v345 = vsub.f32 0.0, %v329
    %v346 = vsub.f32 0.0, %v330
    %v347 = vsub.f32 0.0, %v331
    %v348 = vmul.f32 %v332, 1.442695
    %v349 = vpow.pop %v348
    %v350 = vmul.f32 %v333, 1.442695
    %v351 = vpow.pop %v350
    %v352 = vmul.f32 %v334, 1.442695
    %v353 = vpow.pop %v352
    %v354 = vmul.f32 %v335, 1.442695
    %v355 = vpow.pop %v354
    %v356 = vmul.f32 %v336, 1.442695
    %v357 = vpow.pop %v356
    %v358 = vmul.f32 %v337, 1.442695
    %v359 = vpow.pop %v358
    %v360 = vmul.f32 %v338, 1.442695
    %v361 = vpow.pop %v360
    %v362 = vmul.f32 %v339, 1.442695
    %v363 = vpow.pop %v362
    %v364 = vmul.f32 %v340, 1.442695
    %v365 = vpow.pop %v364
    %v366 = vmul.f32 %v341, 1.442695
    %v367 = vpow.pop %v366
    %v368 = vmul.f32 %v342, 1.442695
    %v369 = vpow.pop %v368
    %v370 = vmul.f32 %v343, 1.442695
    %v371 = vpow.pop %v370
    %v372 = vmul.f32 %v344, 1.442695
    %v373 = vpow.pop %v372
    %v374 = vmul.f32 %v345, 1.442695
    %v375 = vpow.pop %v374
    %v376 = vmul.f32 %v346, 1.442695
    %v377 = vpow.pop %v376
    %v378 = vmul.f32 %v347, 1.442695
    %v379 = vpow.pop %v378
    %v380 = vadd.f32 %v349, 1.0
    %v381 = vlog2.pop %v380
    %v382 = vmul.f32 %v381, 0.6931472
    %v383 = vmul.f32 -0.5, %v349
    %v384 = vadd.f32 %v383, 1.0
    %v385 = vmul.f32 %v384, %v349
    %v386 = vand.u32 2147483647, %v349
    %vm387 = vcmp.lt.f32.partialorder %v386, 0.0004427343
    %v388 = vsel %vm387, %v385, %v382
    %v389 = vadd.f32 %v351, 1.0
    %v390 = vlog2.pop %v389
    %v391 = vmul.f32 %v390, 0.6931472
    %v392 = vmul.f32 -0.5, %v351
    %v393 = vadd.f32 %v392, 1.0
    %v394 = vmul.f32 %v393, %v351
    %v395 = vand.u32 2147483647, %v351
    %vm396 = vcmp.lt.f32.partialorder %v395, 0.0004427343
    %v397 = vsel %vm396, %v394, %v391
    %v398 = vadd.f32 %v353, 1.0
    %v399 = vlog2.pop %v398
    %v400 = vmul.f32 %v399, 0.6931472
    %v401 = vmul.f32 -0.5, %v353
    %v402 = vadd.f32 %v401, 1.0
    %v403 = vmul.f32 %v402, %v353
    %v404 = vand.u32 2147483647, %v353
    %vm405 = vcmp.lt.f32.partialorder %v404, 0.0004427343
    %v406 = vsel %vm405, %v403, %v400
    %v407 = vadd.f32 %v355, 1.0
    %v408 = vlog2.pop %v407
    %v409 = vmul.f32 %v408, 0.6931472
    %v410 = vmul.f32 -0.5, %v355
    %v411 = vadd.f32 %v410, 1.0
    %v412 = vmul.f32 %v411, %v355
    %v413 = vand.u32 2147483647, %v355
    %vm414 = vcmp.lt.f32.partialorder %v413, 0.0004427343
    %v415 = vsel %vm414, %v412, %v409
    %v416 = vadd.f32 %v357, 1.0
    %v417 = vlog2.pop %v416
    %v418 = vmul.f32 %v417, 0.6931472
    %v419 = vmul.f32 -0.5, %v357
    %v420 = vadd.f32 %v419, 1.0
    %v421 = vmul.f32 %v420, %v357
    %v422 = vand.u32 2147483647, %v357
    %vm423 = vcmp.lt.f32.partialorder %v422, 0.0004427343
    %v424 = vsel %vm423, %v421, %v418
    %v425 = vadd.f32 %v359, 1.0
    %v426 = vlog2.pop %v425
    %v427 = vmul.f32 %v426, 0.6931472
    %v428 = vmul.f32 -0.5, %v359
    %v429 = vadd.f32 %v428, 1.0
    %v430 = vmul.f32 %v429, %v359
    %v431 = vand.u32 2147483647, %v359
    %vm432 = vcmp.lt.f32.partialorder %v431, 0.0004427343
    %v433 = vsel %vm432, %v430, %v427
    %v434 = vadd.f32 %v361, 1.0
    %v435 = vlog2.pop %v434
    %v436 = vmul.f32 %v435, 0.6931472
    %v437 = vmul.f32 -0.5, %v361
    %v438 = vadd.f32 %v437, 1.0
    %v439 = vmul.f32 %v438, %v361
    %v440 = vand.u32 2147483647, %v361
    %vm441 = vcmp.lt.f32.partialorder %v440, 0.0004427343
    %v442 = vsel %vm441, %v439, %v436
    %v443 = vadd.f32 %v363, 1.0
    %v444 = vlog2.pop %v443
    %v445 = vmul.f32 %v444, 0.6931472
    %v446 = vmul.f32 -0.5, %v363
    %v447 = vadd.f32 %v446, 1.0
    %v448 = vmul.f32 %v447, %v363
    %v449 = vand.u32 2147483647, %v363
    %vm450 = vcmp.lt.f32.partialorder %v449, 0.0004427343
    %v451 = vsel %vm450, %v448, %v445
    %v452 = vadd.f32 %v365, 1.0
    %v453 = vlog2.pop %v452
    %v454 = vmul.f32 %v453, 0.6931472
    %v455 = vmul.f32 -0.5, %v365
    %v456 = vadd.f32 %v455, 1.0
    %v457 = vmul.f32 %v456, %v365
    %v458 = vand.u32 2147483647, %v365
    %vm459 = vcmp.lt.f32.partialorder %v458, 0.0004427343
    %v460 = vsel %vm459, %v457, %v454
    %v461 = vadd.f32 %v367, 1.0
    %v462 = vlog2.pop %v461
    %v463 = vmul.f32 %v462, 0.6931472
    %v464 = vmul.f32 -0.5, %v367
    %v465 = vadd.f32 %v464, 1.0
    %v466 = vmul.f32 %v465, %v367
    %v467 = vand.u32 2147483647, %v367
    %vm468 = vcmp.lt.f32.partialorder %v467, 0.0004427343
    %v469 = vsel %vm468, %v466, %v463
    %v470 = vadd.f32 %v369, 1.0
    %v471 = vlog2.pop %v470
    %v472 = vmul.f32 %v471, 0.6931472
    %v473 = vmul.f32 -0.5, %v369
    %v474 = vadd.f32 %v473, 1.0
    %v475 = vmul.f32 %v474, %v369
    %v476 = vand.u32 2147483647, %v369
    %vm477 = vcmp.lt.f32.partialorder %v476, 0.0004427343
    %v478 = vsel %vm477, %v475, %v472
    %v479 = vadd.f32 %v371, 1.0
    %v480 = vlog2.pop %v479
    %v481 = vmul.f32 %v480, 0.6931472
    %v482 = vmul.f32 -0.5, %v371
    %v483 = vadd.f32 %v482, 1.0
    %v484 = vmul.f32 %v483, %v371
    %v485 = vand.u32 2147483647, %v371
    %vm486 = vcmp.lt.f32.partialorder %v485, 0.0004427343
    %v487 = vsel %vm486, %v484, %v481
    %v488 = vadd.f32 %v373, 1.0
    %v489 = vlog2.pop %v488
    %v490 = vmul.f32 %v489, 0.6931472
    %v491 = vmul.f32 -0.5, %v373
    %v492 = vadd.f32 %v491, 1.0
    %v493 = vmul.f32 %v492, %v373
    %v494 = vand.u32 2147483647, %v373
    %vm495 = vcmp.lt.f32.partialorder %v494, 0.0004427343
    %v496 = vsel %vm495, %v493, %v490
    %v497 = vadd.f32 %v375, 1.0
    %v498 = vlog2.pop %v497
    %v499 = vmul.f32 %v498, 0.6931472
    %v500 = vmul.f32 -0.5, %v375
    %v501 = vadd.f32 %v500, 1.0
    %v502 = vmul.f32 %v501, %v375
    %v503 = vand.u32 2147483647, %v375
    %vm504 = vcmp.lt.f32.partialorder %v503, 0.0004427343
    %v505 = vsel %vm504, %v502, %v499
    %v506 = vadd.f32 %v377, 1.0
    %v507 = vlog2.pop %v506
    %v508 = vmul.f32 %v507, 0.6931472
    %v509 = vmul.f32 -0.5, %v377
    %v510 = vadd.f32 %v509, 1.0
    %v511 = vmul.f32 %v510, %v377
    %v512 = vand.u32 2147483647, %v377
    %vm513 = vcmp.lt.f32.partialorder %v512, 0.0004427343
    %v514 = vsel %vm513, %v511, %v508
    %v515 = vadd.f32 %v379, 1.0
    %v516 = vlog2.pop %v515
    %v517 = vmul.f32 %v516, 0.6931472
    %v518 = vmul.f32 -0.5, %v379
    %v519 = vadd.f32 %v518, 1.0
    %v520 = vmul.f32 %v519, %v379
    %v521 = vand.u32 2147483647, %v379
    %vm522 = vcmp.lt.f32.partialorder %v521, 0.0004427343
    %v523 = vsel %vm522, %v520, %v517
    %v524 = vadd.f32 %v268, %v388
    %v525 = vadd.f32 %v269, %v397
    %v526 = vadd.f32 %v270, %v406
    %v527 = vadd.f32 %v271, %v415
    %v528 = vadd.f32 %v272, %v424
    %v529 = vadd.f32 %v273, %v433
    %v530 = vadd.f32 %v274, %v442
    %v531 = vadd.f32 %v275, %v451
    %v532 = vadd.f32 %v276, %v460
    %v533 = vadd.f32 %v277, %v469
    %v534 = vadd.f32 %v278, %v478
    %v535 = vadd.f32 %v279, %v487
    %v536 = vadd.f32 %v280, %v496
    %v537 = vadd.f32 %v281, %v505
    %v538 = vadd.f32 %v282, %v514
    %v539 = vadd.f32 %v283, %v523
    %v540 = vsel %vm284, %v300, %v524
    %v541 = vsel %vm285, %v301, %v525
    %v542 = vsel %vm286, %v302, %v526
    %v543 = vsel %vm287, %v303, %v527
    %v544 = vsel %vm288, %v304, %v528
    %v545 = vsel %vm289, %v305, %v529
    %v546 = vsel %vm290, %v306, %v530
    %v547 = vsel %vm291, %v307, %v531
    %v548 = vsel %vm292, %v308, %v532
    %v549 = vsel %vm293, %v309, %v533
    %v550 = vsel %vm294, %v310, %v534
    %v551 = vsel %vm295, %v311, %v535
    %v552 = vsel %vm296, %v312, %v536
    %v553 = vsel %vm297, %v313, %v537
    %v554 = vsel %vm298, %v314, %v538
    %v555 = vsel %vm299, %v315, %v539
    %v556 = vsub.f32 %v540, 0.6931472
    %v557 = vsub.f32 %v541, 0.6931472
    %v558 = vsub.f32 %v542, 0.6931472
    %v559 = vsub.f32 %v543, 0.6931472
    %v560 = vsub.f32 %v544, 0.6931472
    %v561 = vsub.f32 %v545, 0.6931472
    %v562 = vsub.f32 %v546, 0.6931472
    %v563 = vsub.f32 %v547, 0.6931472
    %v564 = vsub.f32 %v548, 0.6931472
    %v565 = vsub.f32 %v549, 0.6931472
    %v566 = vsub.f32 %v550, 0.6931472
    %v567 = vsub.f32 %v551, 0.6931472
    %v568 = vsub.f32 %v552, 0.6931472
    %v569 = vsub.f32 %v553, 0.6931472
    %v570 = vsub.f32 %v554, 0.6931472
    %v571 = vsub.f32 %v555, 0.6931472
    %v573 = vlaneseq
    %v574 = vshrl.u32 %v573, 7
    %v575 = vsub.s32 0, %v574
    %v576 = vrot.slane %v50, %v575
    %578 = vmatprep.subr.mxu0 0.0
    %579 = vmatpush1.msra.mxu0 %v32
    %580 = vmatprep.subr.mxu0 0.0
    %581 = vmatpush1.msra.mxu0 %v33
    %582 = vmatprep.subr.mxu0 0.0
    %583 = vmatpush1.msra.mxu0 %v34
    %584 = vmatprep.subr.mxu0 0.0
    %585 = vmatpush1.msra.mxu0 %v35
    %586 = vmatprep.subr.mxu0 0.0
    %587 = vmatpush1.msra.mxu0 %v36
    %588 = vmatprep.subr.mxu0 0.0
    %589 = vmatpush1.msra.mxu0 %v37
    %590 = vmatprep.subr.mxu0 0.0
    %591 = vmatpush1.msra.mxu0 %v38
    %592 = vmatprep.subr.mxu0 0.0
    %593 = vmatpush1.msra.mxu0 %v39
    %594 = vmatprep.subr.mxu0 0.0
    %595 = vmatpush1.msra.mxu0 %v40
    %596 = vmatprep.subr.mxu0 0.0
    %597 = vmatpush1.msra.mxu0 %v41
    %598 = vmatprep.subr.mxu0 0.0
    %599 = vmatpush1.msra.mxu0 %v42
    %600 = vmatprep.subr.mxu0 0.0
    %601 = vmatpush1.msra.mxu0 %v43
    %602 = vmatprep.subr.mxu0 0.0
    %603 = vmatpush1.msra.mxu0 %v44
    %604 = vmatprep.subr.mxu0 0.0
    %605 = vmatpush1.msra.mxu0 %v45
    %606 = vmatprep.subr.mxu0 0.0
    %607 = vmatpush1.msra.mxu0 %v46
    %608 = vmatprep.subr.mxu0 0.0
    %609 = vmatpush1.msra.mxu0 %v47
    %610 = vmatprep.subr.mxu0 0.0
    %611 = vmatpush1.msra.mxu0 0.0
    %612 = vmatprep.subr.mxu0 0.0
    %613 = vmatpush1.msra.mxu0 0.0
    %614 = vmatprep.subr.mxu0 0.0
    %615 = vmatpush1.msra.mxu0 0.0
    %616 = vmatprep.subr.mxu0 0.0
    %617 = vmatpush1.msra.mxu0 0.0
    %618 = vmatprep.subr.mxu0 0.0
    %619 = vmatpush1.msra.mxu0 0.0
    %620 = vmatprep.subr.mxu0 0.0
    %621 = vmatpush1.msra.mxu0 0.0
    %622 = vmatprep.subr.mxu0 0.0
    %623 = vmatpush1.msra.mxu0 0.0
    %624 = vmatprep.subr.mxu0 0.0
    %625 = vmatpush1.msra.mxu0 0.0
    %626 = vmatprep.subr.mxu0 0.0
    %627 = vmatpush1.msra.mxu0 0.0
    %628 = vmatprep.subr.mxu0 0.0
    %629 = vmatpush1.msra.mxu0 0.0
    %630 = vmatprep.subr.mxu0 0.0
    %631 = vmatpush1.msra.mxu0 0.0
    %632 = vmatprep.subr.mxu0 0.0
    %633 = vmatpush1.msra.mxu0 0.0
    %634 = vmatprep.subr.mxu0 0.0
    %635 = vmatpush1.msra.mxu0 0.0
    %636 = vmatprep.subr.mxu0 0.0
    %637 = vmatpush1.msra.mxu0 0.0
    %638 = vmatprep.subr.mxu0 0.0
    %639 = vmatpush1.msra.mxu0 0.0
    %640 = vmatprep.subr.mxu0 0.0
    %641 = vmatpush1.msra.mxu0 0.0
    %642 = vmatprep.mubr.f32.mxu0 0.0
    %643 = vmatmul.mubr.f32.gmra.mrb[0].mxu0 %v556
    %v644 = vpop.f32.mrb[0].mxu0
    %v645 = vadd.f32 %v576, %v644
    %v646 = vpop.f32.mrb[0].mxu0
    %647 = vmatprep.mubr.f32.mxu0 0.0
    %648 = vmatmul.mubr.f32.gmra.mrb[0].mxu0 %v557
    %v649 = vpop.f32.mrb[0].mxu0
    %v650 = vadd.f32 %v576, %v649
    %v651 = vpop.f32.mrb[0].mxu0
    %652 = vmatprep.mubr.f32.mxu0 0.0
    %653 = vmatmul.mubr.f32.gmra.mrb[0].mxu0 %v558
    %v654 = vpop.f32.mrb[0].mxu0
    %v655 = vadd.f32 %v576, %v654
    %v656 = vpop.f32.mrb[0].mxu0
    %657 = vmatprep.mubr.f32.mxu0 0.0
    %658 = vmatmul.mubr.f32.gmra.mrb[0].mxu0 %v559
    %v659 = vpop.f32.mrb[0].mxu0
    %v660 = vadd.f32 %v576, %v659
    %v661 = vpop.f32.mrb[0].mxu0
    %662 = vmatprep.mubr.f32.mxu0 0.0
    %663 = vmatmul.mubr.f32.gmra.mrb[0].mxu0 %v560
    %v664 = vpop.f32.mrb[0].mxu0
    %v665 = vadd.f32 %v576, %v664
    %v666 = vpop.f32.mrb[0].mxu0
    %667 = vmatprep.mubr.f32.mxu0 0.0
    %668 = vmatmul.mubr.f32.gmra.mrb[0].mxu0 %v561
    %v669 = vpop.f32.mrb[0].mxu0
    %v670 = vadd.f32 %v576, %v669
    %v671 = vpop.f32.mrb[0].mxu0
    %672 = vmatprep.mubr.f32.mxu0 0.0
    %673 = vmatmul.mubr.f32.gmra.mrb[0].mxu0 %v562
    %v674 = vpop.f32.mrb[0].mxu0
    %v675 = vadd.f32 %v576, %v674
    %v676 = vpop.f32.mrb[0].mxu0
    %677 = vmatprep.mubr.f32.mxu0 0.0
    %678 = vmatmul.mubr.f32.gmra.mrb[0].mxu0 %v563
    %v679 = vpop.f32.mrb[0].mxu0
    %v680 = vadd.f32 %v576, %v679
    %v681 = vpop.f32.mrb[0].mxu0
    %682 = vmatprep.mubr.f32.mxu0 0.0
    %683 = vmatmul.mubr.f32.gmra.mrb[0].mxu0 %v564
    %v684 = vpop.f32.mrb[0].mxu0
    %v685 = vadd.f32 %v576, %v684
    %v686 = vpop.f32.mrb[0].mxu0
    %687 = vmatprep.mubr.f32.mxu0 0.0
    %688 = vmatmul.mubr.f32.gmra.mrb[0].mxu0 %v565
    %v689 = vpop.f32.mrb[0].mxu0
    %v690 = vadd.f32 %v576, %v689
    %v691 = vpop.f32.mrb[0].mxu0
    %692 = vmatprep.mubr.f32.mxu0 0.0
    %693 = vmatmul.mubr.f32.gmra.mrb[0].mxu0 %v566
    %v694 = vpop.f32.mrb[0].mxu0
    %v695 = vadd.f32 %v576, %v694
    %v696 = vpop.f32.mrb[0].mxu0
    %697 = vmatprep.mubr.f32.mxu0 0.0
    %698 = vmatmul.mubr.f32.gmra.mrb[0].mxu0 %v567
    %v699 = vpop.f32.mrb[0].mxu0
    %v700 = vadd.f32 %v576, %v699
    %v701 = vpop.f32.mrb[0].mxu0
    %702 = vmatprep.mubr.f32.mxu0 0.0
    %703 = vmatmul.mubr.f32.gmra.mrb[0].mxu0 %v568
    %v704 = vpop.f32.mrb[0].mxu0
    %v705 = vadd.f32 %v576, %v704
    %v706 = vpop.f32.mrb[0].mxu0
    %707 = vmatprep.mubr.f32.mxu0 0.0
    %708 = vmatmul.mubr.f32.gmra.mrb[0].mxu0 %v569
    %v709 = vpop.f32.mrb[0].mxu0
    %v710 = vadd.f32 %v576, %v709
    %v711 = vpop.f32.mrb[0].mxu0
    %712 = vmatprep.mubr.f32.mxu0 0.0
    %713 = vmatmul.mubr.f32.gmra.mrb[0].mxu0 %v570
    %v714 = vpop.f32.mrb[0].mxu0
    %v715 = vadd.f32 %v576, %v714
    %v716 = vpop.f32.mrb[0].mxu0
    %717 = vmatprep.mubr.f32.mxu0 0.0
    %718 = vmatmul.mubr.f32.gmra.mrb[0].mxu0 %v571
    %v719 = vpop.f32.mrb[0].mxu0
    %v720 = vadd.f32 %v576, %v719
    %v721 = vpop.f32.mrb[0].mxu0
    %722 = vdwg.mxu0
    %v723 = vmax.f32 %v645, 0.0
    %v724 = vmax.f32 %v650, 0.0
    %v725 = vmax.f32 %v655, 0.0
    %v726 = vmax.f32 %v660, 0.0
    %v727 = vmax.f32 %v665, 0.0
    %v728 = vmax.f32 %v670, 0.0
    %v729 = vmax.f32 %v675, 0.0
    %v730 = vmax.f32 %v680, 0.0
    %v731 = vmax.f32 %v685, 0.0
    %v732 = vmax.f32 %v690, 0.0
    %v733 = vmax.f32 %v695, 0.0
    %v734 = vmax.f32 %v700, 0.0
    %v735 = vmax.f32 %v705, 0.0
    %v736 = vmax.f32 %v710, 0.0
    %v737 = vmax.f32 %v715, 0.0
    %v738 = vmax.f32 %v720, 0.0
    %vm739 = vcmp.ne.f32.partialorder %v645, %v645
    %vm740 = vcmp.ne.f32.partialorder %v650, %v650
    %vm741 = vcmp.ne.f32.partialorder %v655, %v655
    %vm742 = vcmp.ne.f32.partialorder %v660, %v660
    %vm743 = vcmp.ne.f32.partialorder %v665, %v665
    %vm744 = vcmp.ne.f32.partialorder %v670, %v670
    %vm745 = vcmp.ne.f32.partialorder %v675, %v675
    %vm746 = vcmp.ne.f32.partialorder %v680, %v680
    %vm747 = vcmp.ne.f32.partialorder %v685, %v685
    %vm748 = vcmp.ne.f32.partialorder %v690, %v690
    %vm749 = vcmp.ne.f32.partialorder %v695, %v695
    %vm750 = vcmp.ne.f32.partialorder %v700, %v700
    %vm751 = vcmp.ne.f32.partialorder %v705, %v705
    %vm752 = vcmp.ne.f32.partialorder %v710, %v710
    %vm753 = vcmp.ne.f32.partialorder %v715, %v715
    %vm754 = vcmp.ne.f32.partialorder %v720, %v720
    %v755 = vadd.f32 %v645, 0.0
    %v756 = vadd.f32 %v650, 0.0
    %v757 = vadd.f32 %v655, 0.0
    %v758 = vadd.f32 %v660, 0.0
    %v759 = vadd.f32 %v665, 0.0
    %v760 = vadd.f32 %v670, 0.0
    %v761 = vadd.f32 %v675, 0.0
    %v762 = vadd.f32 %v680, 0.0
    %v763 = vadd.f32 %v685, 0.0
    %v764 = vadd.f32 %v690, 0.0
    %v765 = vadd.f32 %v695, 0.0
    %v766 = vadd.f32 %v700, 0.0
    %v767 = vadd.f32 %v705, 0.0
    %v768 = vadd.f32 %v710, 0.0
    %v769 = vadd.f32 %v715, 0.0
    %v770 = vadd.f32 %v720, 0.0
    %v771 = vand.u32 2147483647, %v645
    %v772 = vand.u32 2147483647, %v650
    %v773 = vand.u32 2147483647, %v655
    %v774 = vand.u32 2147483647, %v660
    %v775 = vand.u32 2147483647, %v665
    %v776 = vand.u32 2147483647, %v670
    %v777 = vand.u32 2147483647, %v675
    %v778 = vand.u32 2147483647, %v680
    %v779 = vand.u32 2147483647, %v685
    %v780 = vand.u32 2147483647, %v690
    %v781 = vand.u32 2147483647, %v695
    %v782 = vand.u32 2147483647, %v700
    %v783 = vand.u32 2147483647, %v705
    %v784 = vand.u32 2147483647, %v710
    %v785 = vand.u32 2147483647, %v715
    %v786 = vand.u32 2147483647, %v720
    %v787 = vsub.f32 0.0, %v771
    %v788 = vsub.f32 0.0, %v772
    %v789 = vsub.f32 0.0, %v773
    %v790 = vsub.f32 0.0, %v774
    %v791 = vsub.f32 0.0, %v775
    %v792 = vsub.f32 0.0, %v776
    %v793 = vsub.f32 0.0, %v777
    %v794 = vsub.f32 0.0, %v778
    %v795 = vsub.f32 0.0, %v779
    %v796 = vsub.f32 0.0, %v780
    %v797 = vsub.f32 0.0, %v781
    %v798 = vsub.f32 0.0, %v782
    %v799 = vsub.f32 0.0, %v783
    %v800 = vsub.f32 0.0, %v784
    %v801 = vsub.f32 0.0, %v785
    %v802 = vsub.f32 0.0, %v786
    %v803 = vmul.f32 %v787, 1.442695
    %v804 = vpow.pop %v803
    %v805 = vmul.f32 %v788, 1.442695
    %v806 = vpow.pop %v805
    %v807 = vmul.f32 %v789, 1.442695
    %v808 = vpow.pop %v807
    %v809 = vmul.f32 %v790, 1.442695
    %v810 = vpow.pop %v809
    %v811 = vmul.f32 %v791, 1.442695
    %v812 = vpow.pop %v811
    %v813 = vmul.f32 %v792, 1.442695
    %v814 = vpow.pop %v813
    %v815 = vmul.f32 %v793, 1.442695
    %v816 = vpow.pop %v815
    %v817 = vmul.f32 %v794, 1.442695
    %v818 = vpow.pop %v817
    %v819 = vmul.f32 %v795, 1.442695
    %v820 = vpow.pop %v819
    %v821 = vmul.f32 %v796, 1.442695
    %v822 = vpow.pop %v821
    %v823 = vmul.f32 %v797, 1.442695
    %v824 = vpow.pop %v823
    %v825 = vmul.f32 %v798, 1.442695
    %v826 = vpow.pop %v825
    %v827 = vmul.f32 %v799, 1.442695
    %v828 = vpow.pop %v827
    %v829 = vmul.f32 %v800, 1.442695
    %v830 = vpow.pop %v829
    %v831 = vmul.f32 %v801, 1.442695
    %v832 = vpow.pop %v831
    %v833 = vmul.f32 %v802, 1.442695
    %v834 = vpow.pop %v833
    %v835 = vadd.f32 %v804, 1.0
    %v836 = vlog2.pop %v835
    %v837 = vmul.f32 %v836, 0.6931472
    %v838 = vmul.f32 -0.5, %v804
    %v839 = vadd.f32 %v838, 1.0
    %v840 = vmul.f32 %v839, %v804
    %v841 = vand.u32 2147483647, %v804
    %vm842 = vcmp.lt.f32.partialorder %v841, 0.0004427343
    %v843 = vsel %vm842, %v840, %v837
    %v844 = vadd.f32 %v806, 1.0
    %v845 = vlog2.pop %v844
    %v846 = vmul.f32 %v845, 0.6931472
    %v847 = vmul.f32 -0.5, %v806
    %v848 = vadd.f32 %v847, 1.0
    %v849 = vmul.f32 %v848, %v806
    %v850 = vand.u32 2147483647, %v806
    %vm851 = vcmp.lt.f32.partialorder %v850, 0.0004427343
    %v852 = vsel %vm851, %v849, %v846
    %v853 = vadd.f32 %v808, 1.0
    %v854 = vlog2.pop %v853
    %v855 = vmul.f32 %v854, 0.6931472
    %v856 = vmul.f32 -0.5, %v808
    %v857 = vadd.f32 %v856, 1.0
    %v858 = vmul.f32 %v857, %v808
    %v859 = vand.u32 2147483647, %v808
    %vm860 = vcmp.lt.f32.partialorder %v859, 0.0004427343
    %v861 = vsel %vm860, %v858, %v855
    %v862 = vadd.f32 %v810, 1.0
    %v863 = vlog2.pop %v862
    %v864 = vmul.f32 %v863, 0.6931472
    %v865 = vmul.f32 -0.5, %v810
    %v866 = vadd.f32 %v865, 1.0
    %v867 = vmul.f32 %v866, %v810
    %v868 = vand.u32 2147483647, %v810
    %vm869 = vcmp.lt.f32.partialorder %v868, 0.0004427343
    %v870 = vsel %vm869, %v867, %v864
    %v871 = vadd.f32 %v812, 1.0
    %v872 = vlog2.pop %v871
    %v873 = vmul.f32 %v872, 0.6931472
    %v874 = vmul.f32 -0.5, %v812
    %v875 = vadd.f32 %v874, 1.0
    %v876 = vmul.f32 %v875, %v812
    %v877 = vand.u32 2147483647, %v812
    %vm878 = vcmp.lt.f32.partialorder %v877, 0.0004427343
    %v879 = vsel %vm878, %v876, %v873
    %v880 = vadd.f32 %v814, 1.0
    %v881 = vlog2.pop %v880
    %v882 = vmul.f32 %v881, 0.6931472
    %v883 = vmul.f32 -0.5, %v814
    %v884 = vadd.f32 %v883, 1.0
    %v885 = vmul.f32 %v884, %v814
    %v886 = vand.u32 2147483647, %v814
    %vm887 = vcmp.lt.f32.partialorder %v886, 0.0004427343
    %v888 = vsel %vm887, %v885, %v882
    %v889 = vadd.f32 %v816, 1.0
    %v890 = vlog2.pop %v889
    %v891 = vmul.f32 %v890, 0.6931472
    %v892 = vmul.f32 -0.5, %v816
    %v893 = vadd.f32 %v892, 1.0
    %v894 = vmul.f32 %v893, %v816
    %v895 = vand.u32 2147483647, %v816
    %vm896 = vcmp.lt.f32.partialorder %v895, 0.0004427343
    %v897 = vsel %vm896, %v894, %v891
    %v898 = vadd.f32 %v818, 1.0
    %v899 = vlog2.pop %v898
    %v900 = vmul.f32 %v899, 0.6931472
    %v901 = vmul.f32 -0.5, %v818
    %v902 = vadd.f32 %v901, 1.0
    %v903 = vmul.f32 %v902, %v818
    %v904 = vand.u32 2147483647, %v818
    %vm905 = vcmp.lt.f32.partialorder %v904, 0.0004427343
    %v906 = vsel %vm905, %v903, %v900
    %v907 = vadd.f32 %v820, 1.0
    %v908 = vlog2.pop %v907
    %v909 = vmul.f32 %v908, 0.6931472
    %v910 = vmul.f32 -0.5, %v820
    %v911 = vadd.f32 %v910, 1.0
    %v912 = vmul.f32 %v911, %v820
    %v913 = vand.u32 2147483647, %v820
    %vm914 = vcmp.lt.f32.partialorder %v913, 0.0004427343
    %v915 = vsel %vm914, %v912, %v909
    %v916 = vadd.f32 %v822, 1.0
    %v917 = vlog2.pop %v916
    %v918 = vmul.f32 %v917, 0.6931472
    %v919 = vmul.f32 -0.5, %v822
    %v920 = vadd.f32 %v919, 1.0
    %v921 = vmul.f32 %v920, %v822
    %v922 = vand.u32 2147483647, %v822
    %vm923 = vcmp.lt.f32.partialorder %v922, 0.0004427343
    %v924 = vsel %vm923, %v921, %v918
    %v925 = vadd.f32 %v824, 1.0
    %v926 = vlog2.pop %v925
    %v927 = vmul.f32 %v926, 0.6931472
    %v928 = vmul.f32 -0.5, %v824
    %v929 = vadd.f32 %v928, 1.0
    %v930 = vmul.f32 %v929, %v824
    %v931 = vand.u32 2147483647, %v824
    %vm932 = vcmp.lt.f32.partialorder %v931, 0.0004427343
    %v933 = vsel %vm932, %v930, %v927
    %v934 = vadd.f32 %v826, 1.0
    %v935 = vlog2.pop %v934
    %v936 = vmul.f32 %v935, 0.6931472
    %v937 = vmul.f32 -0.5, %v826
    %v938 = vadd.f32 %v937, 1.0
    %v939 = vmul.f32 %v938, %v826
    %v940 = vand.u32 2147483647, %v826
    %vm941 = vcmp.lt.f32.partialorder %v940, 0.0004427343
    %v942 = vsel %vm941, %v939, %v936
    %v943 = vadd.f32 %v828, 1.0
    %v944 = vlog2.pop %v943
    %v945 = vmul.f32 %v944, 0.6931472
    %v946 = vmul.f32 -0.5, %v828
    %v947 = vadd.f32 %v946, 1.0
    %v948 = vmul.f32 %v947, %v828
    %v949 = vand.u32 2147483647, %v828
    %vm950 = vcmp.lt.f32.partialorder %v949, 0.0004427343
    %v951 = vsel %vm950, %v948, %v945
    %v952 = vadd.f32 %v830, 1.0
    %v953 = vlog2.pop %v952
    %v954 = vmul.f32 %v953, 0.6931472
    %v955 = vmul.f32 -0.5, %v830
    %v956 = vadd.f32 %v955, 1.0
    %v957 = vmul.f32 %v956, %v830
    %v958 = vand.u32 2147483647, %v830
    %vm959 = vcmp.lt.f32.partialorder %v958, 0.0004427343
    %v960 = vsel %vm959, %v957, %v954
    %v961 = vadd.f32 %v832, 1.0
    %v962 = vlog2.pop %v961
    %v963 = vmul.f32 %v962, 0.6931472
    %v964 = vmul.f32 -0.5, %v832
    %v965 = vadd.f32 %v964, 1.0
    %v966 = vmul.f32 %v965, %v832
    %v967 = vand.u32 2147483647, %v832
    %vm968 = vcmp.lt.f32.partialorder %v967, 0.0004427343
    %v969 = vsel %vm968, %v966, %v963
    %v970 = vadd.f32 %v834, 1.0
    %v971 = vlog2.pop %v970
    %v972 = vmul.f32 %v971, 0.6931472
    %v973 = vmul.f32 -0.5, %v834
    %v974 = vadd.f32 %v973, 1.0
    %v975 = vmul.f32 %v974, %v834
    %v976 = vand.u32 2147483647, %v834
    %vm977 = vcmp.lt.f32.partialorder %v976, 0.0004427343
    %v978 = vsel %vm977, %v975, %v972
    %v979 = vadd.f32 %v723, %v843
    %v980 = vadd.f32 %v724, %v852
    %v981 = vadd.f32 %v725, %v861
    %v982 = vadd.f32 %v726, %v870
    %v983 = vadd.f32 %v727, %v879
    %v984 = vadd.f32 %v728, %v888
    %v985 = vadd.f32 %v729, %v897
    %v986 = vadd.f32 %v730, %v906
    %v987 = vadd.f32 %v731, %v915
    %v988 = vadd.f32 %v732, %v924
    %v989 = vadd.f32 %v733, %v933
    %v990 = vadd.f32 %v734, %v942
    %v991 = vadd.f32 %v735, %v951
    %v992 = vadd.f32 %v736, %v960
    %v993 = vadd.f32 %v737, %v969
    %v994 = vadd.f32 %v738, %v978
    %v995 = vsel %vm739, %v755, %v979
    %v996 = vsel %vm740, %v756, %v980
    %v997 = vsel %vm741, %v757, %v981
    %v998 = vsel %vm742, %v758, %v982
    %v999 = vsel %vm743, %v759, %v983
    %v1000 = vsel %vm744, %v760, %v984
    %v1001 = vsel %vm745, %v761, %v985
    %v1002 = vsel %vm746, %v762, %v986
    %v1003 = vsel %vm747, %v763, %v987
    %v1004 = vsel %vm748, %v764, %v988
    %v1005 = vsel %vm749, %v765, %v989
    %v1006 = vsel %vm750, %v766, %v990
    %v1007 = vsel %vm751, %v767, %v991
    %v1008 = vsel %vm752, %v768, %v992
    %v1009 = vsel %vm753, %v769, %v993
    %v1010 = vsel %vm754, %v770, %v994
    %v1011 = vsub.f32 %v995, 0.6931472
    %v1012 = vsub.f32 %v996, 0.6931472
    %v1013 = vsub.f32 %v997, 0.6931472
    %v1014 = vsub.f32 %v998, 0.6931472
    %v1015 = vsub.f32 %v999, 0.6931472
    %v1016 = vsub.f32 %v1000, 0.6931472
    %v1017 = vsub.f32 %v1001, 0.6931472
    %v1018 = vsub.f32 %v1002, 0.6931472
    %v1019 = vsub.f32 %v1003, 0.6931472
    %v1020 = vsub.f32 %v1004, 0.6931472
    %v1021 = vsub.f32 %v1005, 0.6931472
    %v1022 = vsub.f32 %v1006, 0.6931472
    %v1023 = vsub.f32 %v1007, 0.6931472
    %v1024 = vsub.f32 %v1008, 0.6931472
    %v1025 = vsub.f32 %v1009, 0.6931472
    %v1026 = vsub.f32 %v1010, 0.6931472
    %v1027 = vstv %s51
    %vm1028 = vcmask 523264
    %v1030 = vsel %vm1028, %v48, 0
    %v1033 = vsel %vm1028, %v1011, 0
    %v1036 = vsel %vm1028, %v1012, 0
    %v1039 = vsel %vm1028, %v1013, 0
    %v1042 = vsel %vm1028, %v1014, 0
    %v1045 = vsel %vm1028, %v1015, 0
    %v1048 = vsel %vm1028, %v1016, 0
    %v1051 = vsel %vm1028, %v1017, 0
    %v1054 = vsel %vm1028, %v1018, 0
    %v1057 = vsel %vm1028, %v1019, 0
    %v1060 = vsel %vm1028, %v1020, 0
    %v1063 = vsel %vm1028, %v1021, 0
    %v1066 = vsel %vm1028, %v1022, 0
    %v1069 = vsel %vm1028, %v1023, 0
    %v1072 = vsel %vm1028, %v1024, 0
    %v1075 = vsel %vm1028, %v1025, 0
    %v1078 = vsel %vm1028, %v1026, 0
    %1080 = vmatprep.subr.mxu0 0.0
    %1081 = vmatpush1.xpose.msra.mxu0 %v1033
    %1082 = vmatprep.subr.mxu0 0.0
    %1083 = vmatpush1.xpose.msra.mxu0 %v1036
    %1084 = vmatprep.subr.mxu0 0.0
    %1085 = vmatpush1.xpose.msra.mxu0 %v1039
    %1086 = vmatprep.subr.mxu0 0.0
    %1087 = vmatpush1.xpose.msra.mxu0 %v1042
    %1088 = vmatprep.subr.mxu0 0.0
    %1089 = vmatpush1.xpose.msra.mxu0 %v1045
    %1090 = vmatprep.subr.mxu0 0.0
    %1091 = vmatpush1.xpose.msra.mxu0 %v1048
    %1092 = vmatprep.subr.mxu0 0.0
    %1093 = vmatpush1.xpose.msra.mxu0 %v1051
    %1094 = vmatprep.subr.mxu0 0.0
    %1095 = vmatpush1.xpose.msra.mxu0 %v1054
    %1096 = vmatprep.subr.mxu0 0.0
    %1097 = vmatpush1.xpose.msra.mxu0 %v1057
    %1098 = vmatprep.subr.mxu0 0.0
    %1099 = vmatpush1.xpose.msra.mxu0 %v1060
    %1100 = vmatprep.subr.mxu0 0.0
    %1101 = vmatpush1.xpose.msra.mxu0 %v1063
    %1102 = vmatprep.subr.mxu0 0.0
    %1103 = vmatpush1.xpose.msra.mxu0 %v1066
    %1104 = vmatprep.subr.mxu0 0.0
    %1105 = vmatpush1.xpose.msra.mxu0 %v1069
    %1106 = vmatprep.subr.mxu0 0.0
    %1107 = vmatpush1.xpose.msra.mxu0 %v1072
    %1108 = vmatprep.subr.mxu0 0.0
    %1109 = vmatpush1.xpose.msra.mxu0 %v1075
    %1110 = vmatprep.subr.mxu0 0.0
    %1111 = vmatpush1.xpose.msra.mxu0 %v1078
    %1112 = vmatprep.subr.mxu0 0.0
    %1113 = vmatpush1.xpose.msra.mxu0 0.0
    %1114 = vmatprep.subr.mxu0 0.0
    %1115 = vmatpush1.xpose.msra.mxu0 0.0
    %1116 = vmatprep.subr.mxu0 0.0
    %1117 = vmatpush1.xpose.msra.mxu0 0.0
    %1118 = vmatprep.subr.mxu0 0.0
    %1119 = vmatpush1.xpose.msra.mxu0 0.0
    %1120 = vmatprep.subr.mxu0 0.0
    %1121 = vmatpush1.xpose.msra.mxu0 0.0
    %1122 = vmatprep.subr.mxu0 0.0
    %1123 = vmatpush1.xpose.msra.mxu0 0.0
    %1124 = vmatprep.subr.mxu0 0.0
    %1125 = vmatpush1.xpose.msra.mxu0 0.0
    %1126 = vmatprep.subr.mxu0 0.0
    %1127 = vmatpush1.xpose.msra.mxu0 0.0
    %1128 = vmatprep.subr.mxu0 0.0
    %1129 = vmatpush1.xpose.msra.mxu0 0.0
    %1130 = vmatprep.subr.mxu0 0.0
    %1131 = vmatpush1.xpose.msra.mxu0 0.0
    %1132 = vmatprep.subr.mxu0 0.0
    %1133 = vmatpush1.xpose.msra.mxu0 0.0
    %1134 = vmatprep.subr.mxu0 0.0
    %1135 = vmatpush1.xpose.msra.mxu0 0.0
    %1136 = vmatprep.subr.mxu0 0.0
    %1137 = vmatpush1.xpose.msra.mxu0 0.0
    %1138 = vmatprep.subr.mxu0 0.0
    %1139 = vmatpush1.xpose.msra.mxu0 0.0
    %1140 = vmatprep.subr.mxu0 0.0
    %1141 = vmatpush1.xpose.msra.mxu0 0.0
    %1142 = vmatprep.subr.mxu0 0.0
    %1143 = vmatpush1.xpose.msra.mxu0 0.0
    %1144 = vmatprep.mubr.f32.mxu0 0.0
    %1145 = vmatmul.mubr.f32.gmra.mrb[0].mxu0 %v1030
    %v1146 = vpop.f32.mrb[0].mxu0
    %v1147 = vadd.f32 %v1027, %v1146
    %v1148 = vpop.f32.mrb[0].mxu0
    %1149 = vdwg.mxu0
    %1150 = vst [vmem:[#allocation3] sm:$0x1] %v1147
    // Predicated region
    $region30: #{_pair_property_call.1} parent=1 // pred_check
      _
    $region31: #{_pair_property_call.1} parent=1 // pred_check_branch
      %1152 = sbr.rel (0) target = $region33
    $region32: #{_pair_property_call.1} parent=1 // pred_region
      %s1154 = ssub.s32 16, 16
      %1155 = vsyncadd [#allocation4], %s1154
      %s1157 = sshll.u32 [#allocation3], 4
      %s1158 = int_to_ptr.vmem [resolvable:$true] %s1157
      %1160 = dma.vmem_to_hbm [thread:$0]  %s1158, 16, %s7, [#allocation4]
    $region33: #{_pair_property_call.1} parent=1 // pred_fallthru
      _
    // Predicated region
    $region34: #{_pair_property_call.1} parent=1 // pred_check
      _
    $region35: #{_pair_property_call.1} parent=1 // pred_check_branch
      %1162 = sbr.rel (0) target = $region37
    $region36: #{_pair_property_call.1} parent=1 // pred_region
      %1163 = dma.done [#allocation4], 16
    $region37: #{_pair_property_call.1} parent=1 // pred_fallthru
      _
    %1164 = vsyncpa [#allocation4], 1

</llo_original>
